<compile_context>
chip_gen: v7x
topology: tpu7x:2x2x1
jax: 0.10.0
libtpu: 0.0.40
codegen_flags: <defaults>
</compile_context>

<pallas_src>
import functools

import jax
import jax.numpy as jnp
from jax import lax
from jax.experimental import pallas as pl
from jax.experimental.pallas import tpu as pltpu

C_IN, C_HID, C_OUT = 3, 16, 4
C_IN_PAD = 8       # pad input channels to one full sublane group
C_OUT_PAD = 8      # pad conv2 output channels to one full sublane group
GREEN_G = 177.0 / 255.0
GREEN_B = 64.0 / 255.0


# ---------------------------------------------------------------- roll probe -
@functools.lru_cache(maxsize=None)
def _roll_is_forward():
    """Self-check of pltpu.roll's rotation convention (tiny probe kernel).

    Returns True when pltpu.roll matches jnp.roll (out[i] = in[(i - shift) % n]).
    The tap extraction adapts its shift sign to whichever convention holds, so
    correctness does not depend on the convention.
    """
    def probe(x_ref, o_ref):
        o_ref[...] = pltpu.roll(x_ref[...], 1, axis=1)

    x = jnp.broadcast_to(jnp.arange(128, dtype=jnp.float32), (8, 128))
    out = pl.pallas_call(
        probe, out_shape=jax.ShapeDtypeStruct((8, 128), jnp.float32))(x)
    return bool(out[0, 0] == 127.0)


# ------------------------------------------------------------------- kernel --
def _extract_taps(x, H, W, roll_forward):
    """(rows, H*W) -> (9*rows, H*W): 3x3 zero-padded neighborhood taps.

    Tap chunk k = (dh+1)*3 + (dw+1) holds, for every output pixel (h, w), the
    value of x at (h+dh, w+dw) (0 outside the image).  Shifts are lane
    rotations of the flattened pixel axis; wrapped pixels are masked to 0.
    """
    rows, HW = x.shape
    lane = lax.broadcasted_iota(jnp.int32, (rows, HW), 1)
    h = lane // W
    w = lane % W
    chunks = []
    for dh in (-1, 0, 1):
        for dw in (-1, 0, 1):
            s = dh * W + dw
            if s == 0:
                shifted = x
            else:
                amt = (-s) % HW if roll_forward else s % HW
                shifted = pltpu.roll(x, amt, axis=1)
            valid = ((h + dh >= 0) & (h + dh < H) &
                     (w + dw >= 0) & (w + dw < W))
            chunks.append(jnp.where(valid, shifted, 0.0))
    return jnp.concatenate(chunks, axis=0)          # sublane-aligned concat


def _fused_kernel(H, W, roll_forward,
                  x_ref, w1_ref, b1_ref, w2_ref, b2_ref, out_ref):
    # x_ref : (1, 8, HW)   channels-first input (rows C_IN..7 zero); also the bg
    # w1_ref: (16, 72)     b1_ref: (16, 1)
    # w2_ref: (8, 144)     b2_ref: (8, 1)        (rows C_OUT..7 zero)
    # out_ref: (1, 24, HW) rows 0-2 edit, 3 alpha, 8-10 edit_on_green, 16-18 comp
    HW = x_ref.shape[-1]
    x = x_ref[0]                                               # (8, HW)

    taps1 = _extract_taps(x, H, W, roll_forward)               # (72, HW)
    hid = jnp.maximum(
        jnp.dot(w1_ref[...], taps1, preferred_element_type=jnp.float32)
        + b1_ref[...], 0.0)                                    # (16, HW)

    taps2 = _extract_taps(hid, H, W, roll_forward)             # (144, HW)
    net = jax.nn.sigmoid(
        jnp.dot(w2_ref[...], taps2, preferred_element_type=jnp.float32)
        + b2_ref[...])                                         # (8, HW)

    alpha = jnp.broadcast_to(net[3:4, :], (C_OUT_PAD, HW))     # broadcast once
    one_minus_a = 1.0 - alpha

    # greenscreen constant image: (0, 177/255, 64/255) per channel row
    row = lax.broadcasted_iota(jnp.int32, (C_OUT_PAD, HW), 0)
    green = jnp.where(row == 1, GREEN_G,
                      jnp.where(row == 2, GREEN_B, 0.0)).astype(jnp.float32)

    out_ref[0, 0:8] = net                                  # edit (0-2), alpha (3)
    out_ref[0, 8:16] = alpha * net + one_minus_a * green   # rows 8-10 valid
    out_ref[0, 16:24] = one_minus_a * x + alpha * net      # rows 16-18 valid


# ----------------------------------------------------------- pallas wrapper --
@functools.partial(jax.jit, static_argnames=("roll_forward",))
def _netg_render_impl(x_nchw, params, *, roll_forward):
    B, C, H, W = x_nchw.shape
    HW = H * W

    # channels-first flattened pixels, channel dim padded to a sublane group
    x_cl = jnp.pad(x_nchw.reshape(B, C, HW),
                   ((0, 0), (0, C_IN_PAD - C), (0, 0)))

    # weights reshaped so each conv is a single (C_out, 9*C_in) x (9*C_in, HW)
    # matmul with the 9 taps folded into the contraction dimension
    w1p = jnp.pad(params['w1'], ((0, 0), (0, C_IN_PAD - C_IN), (0, 0)))
    w1_mat = jnp.transpose(w1p, (2, 0, 1)).reshape(C_HID, 9 * C_IN_PAD)
    b1_col = params['b1'].reshape(C_HID, 1)
    w2_mat = jnp.transpose(params['w2'], (2, 0, 1)).reshape(C_OUT, 9 * C_HID)
    w2_mat = jnp.pad(w2_mat, ((0, C_OUT_PAD - C_OUT), (0, 0)))
    b2_col = jnp.pad(params['b2'].reshape(C_OUT, 1),
                     ((0, C_OUT_PAD - C_OUT), (0, 0)))

    kernel = functools.partial(_fused_kernel, H, W, roll_forward)
    out = pl.pallas_call(
        kernel,
        out_shape=jax.ShapeDtypeStruct((B, 3 * C_OUT_PAD, HW), jnp.float32),
        grid=(B,),
        in_specs=[
            pl.BlockSpec((1, C_IN_PAD, HW), lambda b: (b, 0, 0)),
            pl.BlockSpec((C_HID, 9 * C_IN_PAD), lambda b: (0, 0)),
            pl.BlockSpec((C_HID, 1), lambda b: (0, 0)),
            pl.BlockSpec((C_OUT_PAD, 9 * C_HID), lambda b: (0, 0)),
            pl.BlockSpec((C_OUT_PAD, 1), lambda b: (0, 0)),
        ],
        out_specs=pl.BlockSpec((1, 3 * C_OUT_PAD, HW), lambda b: (b, 0, 0)),
        compiler_params=pltpu.CompilerParams(
            dimension_semantics=("parallel",)),
    )(x_cl, w1_mat, b1_col, w2_mat, b2_col)

    edit = out[:, 0:3].reshape(B, 3, H, W)
    alpha = jnp.broadcast_to(out[:, 3:4], (B, 3, HW)).reshape(B, 3, H, W)
    eog = out[:, 8:11].reshape(B, 3, H, W)
    comp = out[:, 16:19].reshape(B, 3, H, W)
    return {'edit': edit, 'alpha': alpha,
            'edit_on_greenscreen': eog, 'composite': comp}


def netg_render(x_nchw, params):
    return _netg_render_impl(x_nchw, params, roll_forward=_roll_is_forward())


def model_forward(inputs, params):
    order = [k for k in ('input_crop', 'input_image') if k in inputs]
    if not order:
        return {}
    # fold both model inputs + batch into a single pallas_call
    x_all = jnp.concatenate([inputs[k] for k in order], axis=0)
    rendered = netg_render(x_all, params)

    outputs = {}
    off = 0
    name_map = {'input_crop': 'output_crop', 'input_image': 'output_image'}
    for k in order:
        n = inputs[k].shape[0]
        outputs[name_map[k]] = {kk: vv[off:off + n] for kk, vv in rendered.items()}
        off += n
    for outer_key in outputs.keys():
        for key, value in outputs[outer_key].items():
            outputs[outer_key][key] = [value[0]]                 # [first sample]
    return outputs


# ------------------------------------------------------- pure-JAX reference --
def _reference(x_nchw, params):
    x = jnp.transpose(x_nchw, (0, 2, 3, 1))
    w1 = params['w1'].reshape(3, 3, C_IN, C_HID)
    w2 = params['w2'].reshape(3, 3, C_HID, C_OUT)
    dn = ('NHWC', 'HWIO', 'NHWC')
    h = lax.conv_general_dilated(x, w1, (1, 1), 'SAME', dimension_numbers=dn)
    h = jnp.maximum(h + params['b1'][0], 0.0)
    o = lax.conv_general_dilated(h, w2, (1, 1), 'SAME', dimension_numbers=dn)
    net = jnp.transpose(jax.nn.sigmoid(o + params['b2'][0]), (0, 3, 1, 2))
    edit = net[:, :3]
    alpha = jnp.repeat(net[:, 3:4], 3, axis=1)
    green = jnp.zeros_like(edit).at[:, 1].set(GREEN_G).at[:, 2].set(GREEN_B)
    eog = alpha * edit + (1 - alpha) * green
    comp = (1 - alpha) * x_nchw + alpha * edit
    return {'edit': edit, 'alpha': alpha,
            'edit_on_greenscreen': eog, 'composite': comp}


def init_params(key):
    k1, k2, k3, k4 = jax.random.split(key, 4)
    return {
        'w1': jax.random.normal(k1, (9, C_IN, C_HID), jnp.float32) * 0.2,
        'b1': jax.random.normal(k2, (1, C_HID), jnp.float32) * 0.05,
        'w2': jax.random.normal(k3, (9, C_HID, C_OUT), jnp.float32) * 0.2,
        'b2': jax.random.normal(k4, (1, C_OUT), jnp.float32) * 0.05,
    }


if __name__ == "__main__":
    key = jax.random.PRNGKey(0)
    kp, kx, kc = jax.random.split(key, 3)
    params = init_params(kp)

    N, H, W = 2, 16, 16
    x_image = jax.random.uniform(kx, (N, C_IN, H, W), jnp.float32)
    x_crop = jax.random.uniform(kc, (N, C_IN, H, W), jnp.float32)
    inputs = {'input_crop': x_crop, 'input_image': x_image}

    out = model_forward(inputs, params)
    jax.block_until_ready(out)

    # sanity check vs pure-JAX reference
    refs = {'output_image': _reference(x_image, params),
            'output_crop': _reference(x_crop, params)}
    for name, ref in refs.items():
        for k in ('edit', 'alpha', 'edit_on_greenscreen', 'composite'):
            got = out[name][k][0]            # (3, H, W) — first batch element
            want = ref[k][0]
            assert got.shape == want.shape, (name, k, got.shape, want.shape)
            err = float(jnp.max(jnp.abs(got - want)))
            assert err < 1e-4, (name, k, err)

    print("KERNEL_OK")
</pallas_src>

<mosaic_0001>
module attributes {stable_mosaic.version = 11 : i64} {
  func.func @probe(%arg0: memref<8x128xf32, #tpu.memory_space<vmem>>, %arg1: memref<8x128xf32, #tpu.memory_space<vmem>>) attributes {dimension_semantics = [], scalar_prefetch = 0 : i64, scratch_operands = 0 : i64, tpu.core_type = #tpu.core_type<tc>} {
    %c0 = arith.constant 0 : index
    %c0_0 = arith.constant 0 : index
    %0 = vector.load %arg0[%c0, %c0_0] : memref<8x128xf32, #tpu.memory_space<vmem>>, vector<8x128xf32>
    %c1_i32 = arith.constant 1 : i32
    %1 = tpu.dynamic_rotate %0 by %c1_i32 dim 1 : vector<8x128xf32>, i32 -> vector<8x128xf32>
    %c0_1 = arith.constant 0 : index
    %c0_2 = arith.constant 0 : index
    %2 = vector.load %arg1[%c0_1, %c0_2] : memref<8x128xf32, #tpu.memory_space<vmem>>, vector<8x128xf32>
    tpu.vector_store %arg1[%c0_1, %c0_2], %1 {strides = array<i32>} : memref<8x128xf32, #tpu.memory_space<vmem>>, vector<8x128xf32>,
    return
  }
}

</mosaic_0001>

<llo_original>
// kernel: tpu_custom_call.1
$region0: #{tpu_custom_call.1}
  #allocation0 [shape = 'u32[]', space=smem, size = 0x4, offset = 0x4, fixed_abs, tag = 'smem constant byte address 0x4 - core index']
  #allocation1 [shape = 'u32[144,128]{1,0:T(1,128)}', space=vmem, size = 0x12000, scoped, tag = 'internal scratch']
  %s0 = inlined_call_operand.hbm [shape: f32[8,128], index: 0, kind: input, shape index: {}]
  %s1 = inlined_call_operand.hbm [shape: f32[8,128], index: 1, kind: output, shape index: {}]
  %s2 = sld [smem:[#allocation0]]
  $region18: #{tpu_custom_call.1} parent=0
    _
  %s4 = ssub.s32 1, %s2
  %s5 = scalar_select 0, %s4, %s2
  $region1: #{tpu_custom_call.1} parent=0
    #allocation2 [shape = 'u8[4096]{0}', space=vmem, size = 0x1000, scoped, tag = 'input window, operand 0, single buffered']
    #allocation3 [shape = 's32[1]{0}', space=sflag, size = 0x4, scoped, tag = 'scoped memory for tpu_custom_call.1']
    #allocation4 [shape = 's32[1]{0}', space=sflag, size = 0x4, scoped, tag = 'scoped memory for tpu_custom_call.1']
    #allocation5 [shape = 'u8[4096]{0}', space=vmem, size = 0x1000, scoped, tag = 'output window, operand 0, single buffered']
    %6 = vsyncpa [#allocation3], 0
    %7 = vsyncpa [#allocation4], 0
    // Predicated region
    $region2: #{tpu_custom_call.1} parent=1 // pred_check
      _
    $region3: #{tpu_custom_call.1} parent=1 // pred_check_branch
      %9 = sbr.rel (0) target = $region5
    $region4: #{tpu_custom_call.1} parent=1 // pred_region
      %s11 = ssub.s32 128, 128
      %12 = vsyncadd [#allocation3], %s11
      %s14 = sshll.u32 [#allocation2], 4
      %s15 = int_to_ptr.vmem [resolvable:$true] %s14
      %17 = dma.hbm_to_vmem [thread:$0]  %s0, 128, %s15, [#allocation3]
    $region5: #{tpu_custom_call.1} parent=1 // pred_fallthru
      _
    // Predicated region
    $region6: #{tpu_custom_call.1} parent=1 // pred_check
      _
    $region7: #{tpu_custom_call.1} parent=1 // pred_check_branch
      %19 = sbr.rel (0) target = $region9
    $region8: #{tpu_custom_call.1} parent=1 // pred_region
      %20 = dma.done [#allocation3], 128
    $region9: #{tpu_custom_call.1} parent=1 // pred_fallthru
      _
    %v21 = vld [vmem:[#allocation2] sm:$0xff]
    %22 = vrot.lane.b32.xlu0 %v21, 1
    %v23 = vpop.permute.xlu0 %22
    %24 = vst [vmem:[#allocation5] sm:$0xff] %v23
    // Predicated region
    $region10: #{tpu_custom_call.1} parent=1 // pred_check
      _
    $region11: #{tpu_custom_call.1} parent=1 // pred_check_branch
      %26 = sbr.rel (0) target = $region13
    $region12: #{tpu_custom_call.1} parent=1 // pred_region
      %s28 = ssub.s32 128, 128
      %29 = vsyncadd [#allocation4], %s28
      %s31 = sshll.u32 [#allocation5], 4
      %s32 = int_to_ptr.vmem [resolvable:$true] %s31
      %34 = dma.vmem_to_hbm [thread:$0]  %s32, 128, %s1, [#allocation4]
    $region13: #{tpu_custom_call.1} parent=1 // pred_fallthru
      _
    // Predicated region
    $region14: #{tpu_custom_call.1} parent=1 // pred_check
      _
    $region15: #{tpu_custom_call.1} parent=1 // pred_check_branch
      %36 = sbr.rel (0) target = $region17
    $region16: #{tpu_custom_call.1} parent=1 // pred_region
      %37 = dma.done [#allocation4], 128
    $region17: #{tpu_custom_call.1} parent=1 // pred_fallthru
      _
    %38 = vsyncpa [#allocation3], 1
    %39 = vsyncpa [#allocation4], 1

</llo_original>
